<compile_context>
chip_gen: v7x
topology: tpu7x:2x2x1
jax: 0.10.0
libtpu: 0.0.40
codegen_flags: <defaults>
</compile_context>

<pallas_src>
import math
import jax
import jax.numpy as jnp
from jax.experimental import pallas as pl
from jax.experimental.pallas import tpu as pltpu

# ----------------------------------------------------------------------------
# "config.model.*" of the PyTorch module, at small synthetic sizes.
# ----------------------------------------------------------------------------
NUM_JOINTS = 17
VOLUME_SIZE = 8            # volume_size (64 in the real config)
CUBOID_SIDE = 250.0
VOLUME_MULTIPLIER = 1.0
VOLUME_SOFTMAX = True
KIND = "mpii"              # base point = keypoints_3d[6, :3]
BACKBONE_OUT_CH = 133      # backbone output channels (process_features expects 133)
PROCESS_FEATURES_CH = 32
BACKBONE_STRIDE = 4        # HRNet: 512x512 image -> 128x128 feature map (/4)

J_PAD = 24                 # joints padded to a multiple of 8 (sublane aligned, not 128)


def _pick_tile(total, cap, align):
    """Largest divisor of `total` that is <= cap and a multiple of `align`
    (or `total` itself if total <= cap / no such divisor exists)."""
    if total <= cap:
        return total
    t = (cap // align) * align
    while t >= align:
        if total % t == 0:
            return t
        t -= align
    return total


# ----------------------------------------------------------------------------
# Kernel A: folded backbone-head + process_features 1x1 (3 -> 32), rows x channels
# ----------------------------------------------------------------------------
def _features_kernel(x_ref, w_ref, b_ref, o_ref):
    o_ref[...] = (jnp.dot(x_ref[...], w_ref[...], preferred_element_type=jnp.float32)
                  + b_ref[...])


def fused_backbone_process_features(x_rows, w_fused, b_fused, tm_cap=4096):
    """x_rows: (M, Cin) channels-last rows.  Single folded 1x1 conv (Cin -> 32)."""
    M, Cin = x_rows.shape
    K1 = 8                                     # Cin padded (3 -> 8)
    Cout = w_fused.shape[1]                    # 32
    tm = min(tm_cap, ((M + 7) // 8) * 8)
    Mp = pl.cdiv(M, tm) * tm
    x_p = jnp.pad(x_rows, ((0, Mp - M), (0, K1 - Cin)))
    w_p = jnp.pad(w_fused, ((0, K1 - Cin), (0, 0)))

    out = pl.pallas_call(
        _features_kernel,
        out_shape=jax.ShapeDtypeStruct((Mp, Cout), jnp.float32),
        grid_spec=pltpu.PrefetchScalarGridSpec(
            num_scalar_prefetch=0,
            grid=(Mp // tm,),
            in_specs=[
                pl.BlockSpec((tm, K1), lambda i: (i, 0)),
                pl.BlockSpec((K1, Cout), lambda i: (0, 0)),
                pl.BlockSpec((1, Cout), lambda i: (0, 0)),
            ],
            out_specs=pl.BlockSpec((tm, Cout), lambda i: (i, 0)),
        ),
        compiler_params=pltpu.CompilerParams(dimension_semantics=("parallel",)),
    )(x_p, w_p, b_fused)
    return out[:M]


# ----------------------------------------------------------------------------
# Kernel B: fused projection + bilinear grid_sample + view-sum + V2V 1x1x1 + multiplier
# (bilinear sampling = factorized one-hot weight matrix @ feature map on the MXU;
#  all views of one batch element stay resident in VMEM; HW is chunked inside the kernel)
# ----------------------------------------------------------------------------
def unproject_sample_v2v(feats, proj_matricies, coord_flat, w_v2v, b_v2v, Hf, Wf,
                         tp_cap=1024, hw_cap=1024):
    """feats: (B, Vn, HW, 32) f32, proj: (B, Vn, 3, 4), coord_flat: (B, V3, 3),
    w_v2v: (32, JP), b_v2v: (JP, 1).  Returns lane-dense logit volumes (B, JP, V3)."""
    B, Vn, HW, CF = feats.shape
    V3 = coord_flat.shape[1]
    JP = w_v2v.shape[1]
    tp = _pick_tile(V3, tp_cap, 128)
    nT = V3 // tp
    hw_chunk = _pick_tile(HW, hw_cap, 8)
    n_chunks = HW // hw_chunk

    def kernel(pm_ref, coord_ref, feat_ref, w_ref, b_ref, out_ref):
        c = coord_ref[0]                                     # (tp, 3)
        x, y, z = c[:, 0:1], c[:, 1:2], c[:, 2:3]
        col_base = jax.lax.broadcasted_iota(jnp.float32, (1, hw_chunk), 1)   # (1, hw_chunk)

        acc = jnp.zeros((tp, CF), jnp.float32)
        for v in range(Vn):                                  # static unroll: views VMEM-resident
            pm = pm_ref[0, v]                                # (3, 4)
            px = pm[0:1, 0:1] * x + pm[0:1, 1:2] * y + pm[0:1, 2:3] * z + pm[0:1, 3:4]
            py = pm[1:2, 0:1] * x + pm[1:2, 1:2] * y + pm[1:2, 2:3] * z + pm[1:2, 3:4]
            pz = pm[2:3, 0:1] * x + pm[2:3, 1:2] * y + pm[2:3, 2:3] * z + pm[2:3, 3:4]
            z_safe = jnp.where(pz == 0.0, 1.0, pz)
            xi = px / z_safe
            yi = py / z_safe
            # matches the reference quirk: x normalized by heatmap_shape[0], y by heatmap_shape[1]
            gx = 2.0 * (xi / Hf - 0.5)
            gy = 2.0 * (yi / Wf - 0.5)
            # grid_sample(align_corners=True, padding_mode='zeros')
            ix = (gx + 1.0) * 0.5 * (Wf - 1)
            iy = (gy + 1.0) * 0.5 * (Hf - 1)
            ix0 = jnp.floor(ix)
            iy0 = jnp.floor(iy)
            wx1 = ix - ix0
            wx0 = 1.0 - wx1
            wy1 = iy - iy0
            wy0 = 1.0 - wy1
            valid = pz > 0.0                                 # reference zeroes voxels behind camera

            def partial_sample(off_idx, off_f):
                hw_f = col_base + off_f                      # (1, hw_chunk), f32 index math
                row_f = jnp.floor(hw_f / Wf)                 # y (height) index of flattened pixel
                col_f = hw_f - row_f * Wf                    # x (width)  index of flattened pixel

                def tap(idx, w, axis_f, size):
                    w_ok = jnp.where((idx >= 0.0) & (idx <= size - 1.0), w, 0.0)   # (tp, 1)
                    return jnp.where(axis_f == idx, w_ok, 0.0)                     # (tp, hw_chunk)

                wmat = ((tap(iy0, wy0, row_f, float(Hf)) + tap(iy0 + 1.0, wy1, row_f, float(Hf)))
                        * (tap(ix0, wx0, col_f, float(Wf)) + tap(ix0 + 1.0, wx1, col_f, float(Wf))))
                wmat = jnp.where(valid, wmat, 0.0)
                feat_chunk = feat_ref[0, v, pl.ds(off_idx, hw_chunk), :]            # (hw_chunk, CF)
                return jnp.dot(wmat.astype(jnp.bfloat16),
                               feat_chunk.astype(jnp.bfloat16),
                               preferred_element_type=jnp.float32)                  # (tp, CF)

            if n_chunks == 1:
                acc = acc + partial_sample(0, 0.0)
            else:
                def chunk_body(ci, a):
                    off = pl.multiple_of(ci * hw_chunk, hw_chunk)
                    return a + partial_sample(off, off.astype(jnp.float32))
                acc = jax.lax.fori_loop(0, n_chunks, chunk_body, acc)

        # fused V2V 1x1x1 stand-in + volume multiplier, emitted lane-dense as (JP, tp)
        logits = jax.lax.dot_general(w_ref[...], acc,
                                     dimension_numbers=(((0,), (1,)), ((), ())),
                                     preferred_element_type=jnp.float32)            # (JP, tp)
        out_ref[0] = (logits + b_ref[...]) * VOLUME_MULTIPLIER

    # TODO(synk): scalar-prefetched per-tile row-band bounds on the Hf axis would cut the
    # dense one-hot FLOP blow-up further; not needed at these sizes.
    return pl.pallas_call(
        kernel,
        out_shape=jax.ShapeDtypeStruct((B, JP, V3), jnp.float32),
        grid_spec=pltpu.PrefetchScalarGridSpec(
            num_scalar_prefetch=0,
            grid=(B, nT),
            in_specs=[
                pl.BlockSpec((1, Vn, 3, 4), lambda b, t: (b, 0, 0, 0)),
                pl.BlockSpec((1, tp, 3), lambda b, t: (b, t, 0)),
                # same block index for all t -> feature map DMA'd once per batch element
                pl.BlockSpec((1, Vn, HW, CF), lambda b, t: (b, 0, 0, 0)),
                pl.BlockSpec((CF, JP), lambda b, t: (0, 0)),
                pl.BlockSpec((JP, 1), lambda b, t: (0, 0)),
            ],
            out_specs=pl.BlockSpec((1, JP, tp), lambda b, t: (b, 0, t)),
        ),
        compiler_params=pltpu.CompilerParams(
            dimension_semantics=("parallel", "parallel"),
            vmem_limit_bytes=48 * 1024 * 1024),
    )(proj_matricies, coord_flat, feats, w_v2v, b_v2v)


# ----------------------------------------------------------------------------
# Kernel C1: streaming online-softmax statistics + softmax-weighted keypoints
# ----------------------------------------------------------------------------
def integrate_stats(logits_vol, coord_flat, tp_cap=4096):
    B, JP, V3 = logits_vol.shape
    tp = _pick_tile(V3, tp_cap, 128)
    nT = V3 // tp

    def kernel(logit_ref, coord_ref, kp_ref, m_ref, l_ref, m_sc, l_sc, acc_sc):
        t = pl.program_id(1)

        @pl.when(t == 0)
        def _():
            m_sc[...] = jnp.full_like(m_sc, -jnp.inf)
            l_sc[...] = jnp.zeros_like(l_sc)
            acc_sc[...] = jnp.zeros_like(acc_sc)

        logits = logit_ref[0]                                        # (JP, tp) lane-dense
        c = coord_ref[0]                                             # (tp, 3)
        m_old = m_sc[...]                                            # (JP, 1)
        m_new = jnp.maximum(m_old, jnp.max(logits, axis=1, keepdims=True))
        scale = jnp.exp(m_old - m_new)
        e = jnp.exp(logits - m_new)                                  # (JP, tp)
        l_sc[...] = l_sc[...] * scale + jnp.sum(e, axis=1, keepdims=True)
        acc_sc[...] = acc_sc[...] * scale + jnp.dot(                 # numerator on the MXU
            e, c, preferred_element_type=jnp.float32)                # (JP, 3)
        m_sc[...] = m_new

        @pl.when(t == pl.num_programs(1) - 1)
        def _():
            kp_ref[0] = acc_sc[...] / l_sc[...]                      # exact divide for outputs
            m_ref[0] = m_sc[...]
            l_ref[0] = l_sc[...]

    # TODO(synk): if B == 1 in deployment, split nT into an outer "parallel" axis with
    # per-core partial (m, l, acc) merged in a tiny epilogue so both v7x cores are used.
    return pl.pallas_call(
        kernel,
        out_shape=(jax.ShapeDtypeStruct((B, JP, 3), jnp.float32),
                   jax.ShapeDtypeStruct((B, JP, 1), jnp.float32),
                   jax.ShapeDtypeStruct((B, JP, 1), jnp.float32)),
        grid_spec=pltpu.PrefetchScalarGridSpec(
            num_scalar_prefetch=0,
            grid=(B, nT),
            in_specs=[
                pl.BlockSpec((1, JP, tp), lambda b, t: (b, 0, t)),
                pl.BlockSpec((1, tp, 3), lambda b, t: (b, t, 0)),
            ],
            out_specs=[
                pl.BlockSpec((1, JP, 3), lambda b, t: (b, 0, 0)),
                pl.BlockSpec((1, JP, 1), lambda b, t: (b, 0, 0)),
                pl.BlockSpec((1, JP, 1), lambda b, t: (b, 0, 0)),
            ],
            scratch_shapes=[pltpu.VMEM((JP, 1), jnp.float32),
                            pltpu.VMEM((JP, 1), jnp.float32),
                            pltpu.VMEM((JP, 3), jnp.float32)],
        ),
        compiler_params=pltpu.CompilerParams(
            dimension_semantics=("parallel", "arbitrary")),
    )(logits_vol, coord_flat)


# ----------------------------------------------------------------------------
# Kernel C2: second streaming pass -> normalized softmax volumes, (B, JP, V3) lane-dense
# ----------------------------------------------------------------------------
def integrate_softmax_volumes(logits_vol, m_st, l_st, tp_cap=4096):
    B, JP, V3 = logits_vol.shape
    tp = _pick_tile(V3, tp_cap, 128)
    nT = V3 // tp

    def kernel(logit_ref, m_ref, l_ref, out_ref):
        e = jnp.exp(logit_ref[0] - m_ref[0])             # (JP, tp)
        out_ref[0] = e * (1.0 / l_ref[0])                # exact per-joint reciprocal

    return pl.pallas_call(
        kernel,
        out_shape=jax.ShapeDtypeStruct((B, JP, V3), jnp.float32),
        grid_spec=pltpu.PrefetchScalarGridSpec(
            num_scalar_prefetch=0,
            grid=(B, nT),
            in_specs=[
                pl.BlockSpec((1, JP, tp), lambda b, t: (b, 0, t)),
                pl.BlockSpec((1, JP, 1), lambda b, t: (b, 0, 0)),
                pl.BlockSpec((1, JP, 1), lambda b, t: (b, 0, 0)),
            ],
            out_specs=pl.BlockSpec((1, JP, tp), lambda b, t: (b, 0, t)),
        ),
        compiler_params=pltpu.CompilerParams(
            dimension_semantics=("parallel", "parallel")),
    )(logits_vol, m_st, l_st)


# ----------------------------------------------------------------------------
# Full forward (eval mode)
# ----------------------------------------------------------------------------
def volumetric_forward(images, proj_matricies, pred_keypoints_3d, params):
    B, Vn, C, H, W = images.shape
    Hf, Wf = H // BACKBONE_STRIDE, W // BACKBONE_STRIDE
    Vs = VOLUME_SIZE
    J = NUM_JOINTS
    JP = J_PAD

    # ---- backbone ----
    # TODO(synk): full PoseHighResolutionNet_PSA (HRNet-W48 + PSA) is not reimplemented;
    # stand-in = /4 average pool + the folded 1x1 head, identical output shape.
    imgs = images.reshape(B * Vn, C, H, W)
    pooled = imgs.reshape(B * Vn, C, Hf, BACKBONE_STRIDE, Wf, BACKBONE_STRIDE).mean(axis=(3, 5))
    x_rows = pooled.transpose(0, 2, 3, 1).reshape(-1, C)            # (N*Hf*Wf, 3) channels-last

    # backbone head (3->133) and process_features (133->32) folded (no nonlinearity between)
    w_fused = params["bb_w"] @ params["pf_w"]                       # (3, 32)
    b_fused = params["bb_b"] @ params["pf_w"] + params["pf_b"]      # (1, 32)
    feat_rows = fused_backbone_process_features(x_rows, w_fused, b_fused)   # (M, 32) f32

    feats = feat_rows.reshape(B, Vn, Hf * Wf, PROCESS_FEATURES_CH)          # channels-last, 32ch
    # reference-layout features for the return value only (compute path stays channels-last)
    features = feat_rows.reshape(B, Vn, Hf, Wf, PROCESS_FEATURES_CH).transpose(0, 1, 4, 2, 3)

    # ---- coordinate volumes (eval: theta = theta_2 = tilt = 0 -> rotations are identity) ----
    base_points = pred_keypoints_3d[:, 6, :3]                       # kind == 'mpii'
    sides = jnp.array([CUBOID_SIDE * 0.75, CUBOID_SIDE * 0.75, CUBOID_SIDE], jnp.float32)
    position = base_points - sides[None, :] / 2.0                   # (B, 3)
    idx = jnp.arange(Vs, dtype=jnp.float32)
    xxx, yyy, zzz = jnp.meshgrid(idx, idx, idx, indexing="ij")
    grid = jnp.stack([xxx, yyy, zzz], axis=-1).reshape(-1, 3)       # (V3, 3)
    coord_flat = position[:, None, :] + (sides / (Vs - 1))[None, None, :] * grid[None]
    coord_volumes = coord_flat.reshape(B, Vs, Vs, Vs, 3)
    cuboids = [{"position": position[b], "sides": sides} for b in range(B)]
    # TODO(synk): camera.update_after_resize / Cuboid3D are host-side object code;
    # synthetic proj_matricies (already at feature resolution) are used directly.

    # ---- V2V stand-in weights (1x1x1 channel mix 32 -> J), joint dim padded to 24 ----
    # TODO(synk): full V2V encoder-decoder not reimplemented; stand-in = 1x1x1 conv fused
    # into the unprojection kernel.
    w_v2v = jnp.pad(params["v2v_w"], ((0, 0), (0, JP - J)))                  # (32, 24)
    b_v2v = jnp.pad(params["v2v_b"], ((0, 0), (0, JP - J))).T                # (24, 1)

    # ---- fused projection + bilinear grid_sample + view sum + V2V 1x1 + multiplier ----
    logits_vol = unproject_sample_v2v(feats, proj_matricies, coord_flat,
                                      w_v2v, b_v2v, Hf, Wf)                  # (B, 24, V3)

    # ---- streaming softmax integration (two passes over the small logit tensor) ----
    kp_raw, m_st, l_st = integrate_stats(logits_vol, coord_flat)
    vol_keypoints_3d = kp_raw[:, :J, :]                                      # (B, J, 3)

    volumes_sm = integrate_softmax_volumes(logits_vol, m_st, l_st)           # (B, 24, V3)
    volumes_out = volumes_sm[:, :J, :].reshape(B, J, Vs, Vs, Vs)

    vol_confidences = None
    return (vol_keypoints_3d, features, volumes_out, vol_confidences,
            cuboids, coord_volumes, base_points)


# ----------------------------------------------------------------------------
# Deterministic parameter init
# ----------------------------------------------------------------------------
def init_params(key):
    def wb(k, cin, cout):
        kw, kb = jax.random.split(k)
        w = jax.random.normal(kw, (cin, cout), jnp.float32) / math.sqrt(cin)
        b = jax.random.normal(kb, (1, cout), jnp.float32) * 0.01
        return w, b

    k0, k1, k2 = jax.random.split(key, 3)
    bb_w, bb_b = wb(k0, 3, BACKBONE_OUT_CH)
    pf_w, pf_b = wb(k1, BACKBONE_OUT_CH, PROCESS_FEATURES_CH)
    v2v_w, v2v_b = wb(k2, PROCESS_FEATURES_CH, NUM_JOINTS)
    return dict(bb_w=bb_w, bb_b=bb_b, pf_w=pf_w, pf_b=pf_b, v2v_w=v2v_w, v2v_b=v2v_b)


if __name__ == "__main__":
    key = jax.random.PRNGKey(0)
    k_img, k_kp, k_par = jax.random.split(key, 3)

    B, Vn, C, H, W = 2, 2, 3, 32, 32          # small stand-in for (.., 3, 512, 512)
    Hf = H // BACKBONE_STRIDE

    images = jax.random.normal(k_img, (B, Vn, C, H, W), jnp.float32)
    pred_keypoints_3d = jax.random.normal(k_kp, (B, NUM_JOINTS, 3), jnp.float32) * 50.0

    # synthetic 3x4 projection matrices mapping the cuboid into the feature plane
    f, cx, cy, tz = 8.0, Hf / 2.0, Hf / 2.0, 600.0
    base_P = jnp.array([[f, 0.0, cx, 0.0],
                        [0.0, f, cy, 0.0],
                        [0.0, 0.0, 1.0, tz]], jnp.float32)
    proj_matricies = jnp.tile(base_P[None, None], (B, Vn, 1, 1))
    proj_matricies = proj_matricies.at[:, :, 0, 3].add(
        jnp.arange(Vn, dtype=jnp.float32)[None, :] * 10.0)

    params = init_params(k_par)

    outs = volumetric_forward(images, proj_matricies, pred_keypoints_3d, params)
    vol_keypoints_3d, features, volumes, vol_confidences, cuboids, coord_volumes, base_points = outs
    jax.block_until_ready((vol_keypoints_3d, features, volumes, coord_volumes, base_points))

    assert vol_keypoints_3d.shape == (B, NUM_JOINTS, 3)
    assert features.shape == (B, Vn, PROCESS_FEATURES_CH, Hf, Hf)
    assert volumes.shape == (B, NUM_JOINTS, VOLUME_SIZE, VOLUME_SIZE, VOLUME_SIZE)
    assert coord_volumes.shape == (B, VOLUME_SIZE, VOLUME_SIZE, VOLUME_SIZE, 3)
    print("KERNEL_OK")
</pallas_src>

<mosaic_0001>
module attributes {stable_mosaic.version = 11 : i64} {
  func.func @_features_kernel(%arg0: i32, %arg1: memref<256x8xf32, #tpu.memory_space<vmem>>, %arg2: memref<8x32xf32, #tpu.memory_space<vmem>>, %arg3: memref<1x32xf32, #tpu.memory_space<vmem>>, %arg4: memref<256x32xf32, #tpu.memory_space<vmem>>) attributes {dimension_semantics = [#tpu.dimension_semantics<parallel>], iteration_bounds = array<i64: 1>, scalar_prefetch = 0 : i64, scratch_operands = 0 : i64, tpu.core_type = #tpu.core_type<tc>, window_params = [{transform_indices = @transform_0, window_bounds = array<i64: 256, 8>}, {pipeline_mode = #tpu.pipeline_mode<synchronous>, transform_indices = @transform_1, window_bounds = array<i64: 8, 32>}, {pipeline_mode = #tpu.pipeline_mode<synchronous>, transform_indices = @transform_2, window_bounds = array<i64: 1, 32>}, {transform_indices = @transform_3, window_bounds = array<i64: 256, 32>}]} {
    %c0 = arith.constant 0 : index
    %c0_0 = arith.constant 0 : index
    %0 = vector.load %arg1[%c0, %c0_0] : memref<256x8xf32, #tpu.memory_space<vmem>>, vector<256x8xf32>
    %c0_1 = arith.constant 0 : index
    %c0_2 = arith.constant 0 : index
    %1 = vector.load %arg2[%c0_1, %c0_2] : memref<8x32xf32, #tpu.memory_space<vmem>>, vector<8x32xf32>
    %cst = arith.constant dense<0.000000e+00> : vector<256x32xf32>
    %2 = tpu.matmul %0, %1, %cst {dimension_numbers = #tpu.dot_dimension_numbers<[1], [0], [0], [1], [0, 0, 1, 1], [], []>} : vector<256x8xf32>, vector<8x32xf32>, vector<256x32xf32> -> vector<256x32xf32>
    %c0_3 = arith.constant 0 : index
    %c0_4 = arith.constant 0 : index
    %3 = vector.load %arg3[%c0_3, %c0_4] : memref<1x32xf32, #tpu.memory_space<vmem>>, vector<1x32xf32>
    %4 = vector.broadcast %3 : vector<1x32xf32> to vector<256x32xf32>
    %5 = arith.addf %2, %4 : vector<256x32xf32>
    %c0_5 = arith.constant 0 : index
    %c0_6 = arith.constant 0 : index
    %6 = vector.load %arg4[%c0_5, %c0_6] : memref<256x32xf32, #tpu.memory_space<vmem>>, vector<256x32xf32>
    tpu.vector_store %arg4[%c0_5, %c0_6], %5 {strides = array<i32>} : memref<256x32xf32, #tpu.memory_space<vmem>>, vector<256x32xf32>,
    return
  }
  func.func @transform_0(%arg0: i32) -> (i32, i32) {
    %c0_i32 = arith.constant 0 : i32
    %c0_i32_0 = arith.constant 0 : i32
    return %arg0, %c0_i32 : i32, i32
  }
  func.func @transform_1(%arg0: i32) -> (i32, i32) {
    %c0_i32 = arith.constant 0 : i32
    %c0_i32_0 = arith.constant 0 : i32
    %c0_i32_1 = arith.constant 0 : i32
    return %c0_i32, %c0_i32_0 : i32, i32
  }
  func.func @transform_2(%arg0: i32) -> (i32, i32) {
    %c0_i32 = arith.constant 0 : i32
    %c0_i32_0 = arith.constant 0 : i32
    %c0_i32_1 = arith.constant 0 : i32
    return %c0_i32, %c0_i32_0 : i32, i32
  }
  func.func @transform_3(%arg0: i32) -> (i32, i32) {
    %c0_i32 = arith.constant 0 : i32
    %c0_i32_0 = arith.constant 0 : i32
    return %arg0, %c0_i32 : i32, i32
  }
}

</mosaic_0001>

<llo_original>
// kernel: tpu_custom_call.1
$region0: #{tpu_custom_call.1}
  #allocation0 [shape = 'u32[]', space=smem, size = 0x4, offset = 0x4, fixed_abs, tag = 'smem constant byte address 0x4 - core index']
  #allocation1 [shape = 'u32[144,128]{1,0:T(1,128)}', space=vmem, size = 0x12000, scoped, tag = 'internal scratch']
  %s0 = inlined_call_operand.vmem [shape: f32[256,8], index: 0, kind: input, shape index: {}]
  %s1 = inlined_call_operand.vmem [shape: f32[8,32], index: 1, kind: input, shape index: {}]
  %s2 = inlined_call_operand.vmem [shape: f32[1,32], index: 2, kind: input, shape index: {}]
  %s3 = inlined_call_operand.vmem [shape: f32[256,32], index: 3, kind: output, shape index: {}]
  %s4 = sld [smem:[#allocation0]]
  $region22: #{tpu_custom_call.1} parent=0
    _
  %s6 = ssub.s32 1, %s4
  %s7 = scalar_select 0, %s6, %s4
  // Predicated region
  $region2: #{tpu_custom_call.1} parent=0 // pred_check
    _
  $region3: #{tpu_custom_call.1} parent=0 // pred_check_branch
    %9 = sbr.rel (0) target = $region5
  $region4: #{tpu_custom_call.1} parent=0 // pred_region
    _
  $region5: #{tpu_custom_call.1} parent=0 // pred_fallthru
    _
  // Predicated region
  $region6: #{tpu_custom_call.1} parent=0 // pred_check
    _
  $region7: #{tpu_custom_call.1} parent=0 // pred_check_branch
    %11 = sbr.rel (0) target = $region9
  $region8: #{tpu_custom_call.1} parent=0 // pred_region
    _
  $region9: #{tpu_custom_call.1} parent=0 // pred_fallthru
    _
  // Predicated region
  $region10: #{tpu_custom_call.1} parent=0 // pred_check
    _
  $region11: #{tpu_custom_call.1} parent=0 // pred_check_branch
    %13 = sbr.rel (0) target = $region13
  $region12: #{tpu_custom_call.1} parent=0 // pred_region
    _
  $region13: #{tpu_custom_call.1} parent=0 // pred_fallthru
    _
  %v14 = vld [vmem:[%s0] sm:$0xff]
  %v15 = vld [vmem:[%s0 + $0x8] sm:$0xff]
  %v16 = vld [vmem:[%s0 + $0x10] sm:$0xff]
  %v17 = vld [vmem:[%s0 + $0x18] sm:$0xff]
  %v18 = vld [vmem:[%s0 + $0x20] sm:$0xff]
  %v19 = vld [vmem:[%s0 + $0x28] sm:$0xff]
  %v20 = vld [vmem:[%s0 + $0x30] sm:$0xff]
  %v21 = vld [vmem:[%s0 + $0x38] sm:$0xff]
  %v22 = vld [vmem:[%s0 + $0x40] sm:$0xff]
  %v23 = vld [vmem:[%s0 + $0x48] sm:$0xff]
  %v24 = vld [vmem:[%s0 + $0x50] sm:$0xff]
  %v25 = vld [vmem:[%s0 + $0x58] sm:$0xff]
  %v26 = vld [vmem:[%s0 + $0x60] sm:$0xff]
  %v27 = vld [vmem:[%s0 + $0x68] sm:$0xff]
  %v28 = vld [vmem:[%s0 + $0x70] sm:$0xff]
  %v29 = vld [vmem:[%s0 + $0x78] sm:$0xff]
  %v30 = vld [vmem:[%s0 + $0x80] sm:$0xff]
  %v31 = vld [vmem:[%s0 + $0x88] sm:$0xff]
  %v32 = vld [vmem:[%s0 + $0x90] sm:$0xff]
  %v33 = vld [vmem:[%s0 + $0x98] sm:$0xff]
  %v34 = vld [vmem:[%s0 + $0xa0] sm:$0xff]
  %v35 = vld [vmem:[%s0 + $0xa8] sm:$0xff]
  %v36 = vld [vmem:[%s0 + $0xb0] sm:$0xff]
  %v37 = vld [vmem:[%s0 + $0xb8] sm:$0xff]
  %v38 = vld [vmem:[%s0 + $0xc0] sm:$0xff]
  %v39 = vld [vmem:[%s0 + $0xc8] sm:$0xff]
  %v40 = vld [vmem:[%s0 + $0xd0] sm:$0xff]
  %v41 = vld [vmem:[%s0 + $0xd8] sm:$0xff]
  %v42 = vld [vmem:[%s0 + $0xe0] sm:$0xff]
  %v43 = vld [vmem:[%s0 + $0xe8] sm:$0xff]
  %v44 = vld [vmem:[%s0 + $0xf0] sm:$0xff]
  %v45 = vld [vmem:[%s0 + $0xf8] sm:$0xff]
  %v46 = vld [vmem:[%s1] sm:$0xff]
  %v47 = vld [vmem:[%s2] sm:$0x1]
  %v49 = vlaneseq
  %v50 = vshrl.u32 %v49, 7
  %v51 = vsub.s32 0, %v50
  %v52 = vrot.slane %v47, %v51
  %vm54 = vcmask 64512
  %v56 = vsel %vm54, %v14, 0
  %v59 = vsel %vm54, %v15, 0
  %v62 = vsel %vm54, %v16, 0
  %v65 = vsel %vm54, %v17, 0
  %v68 = vsel %vm54, %v18, 0
  %v71 = vsel %vm54, %v19, 0
  %v74 = vsel %vm54, %v20, 0
  %v77 = vsel %vm54, %v21, 0
  %v80 = vsel %vm54, %v22, 0
  %v83 = vsel %vm54, %v23, 0
  %v86 = vsel %vm54, %v24, 0
  %v89 = vsel %vm54, %v25, 0
  %v92 = vsel %vm54, %v26, 0
  %v95 = vsel %vm54, %v27, 0
  %v98 = vsel %vm54, %v28, 0
  %v101 = vsel %vm54, %v29, 0
  %v104 = vsel %vm54, %v30, 0
  %v107 = vsel %vm54, %v31, 0
  %v110 = vsel %vm54, %v32, 0
  %v113 = vsel %vm54, %v33, 0
  %v116 = vsel %vm54, %v34, 0
  %v119 = vsel %vm54, %v35, 0
  %v122 = vsel %vm54, %v36, 0
  %v125 = vsel %vm54, %v37, 0
  %v128 = vsel %vm54, %v38, 0
  %v131 = vsel %vm54, %v39, 0
  %v134 = vsel %vm54, %v40, 0
  %v137 = vsel %vm54, %v41, 0
  %v140 = vsel %vm54, %v42, 0
  %v143 = vsel %vm54, %v43, 0
  %v146 = vsel %vm54, %v44, 0
  %v149 = vsel %vm54, %v45, 0
  %151 = vmatprep.subr.mxu0 0.0
  %152 = vmatpush1.msra.mxu0 %v46
  %153 = vmatprep.subr.mxu0 0.0
  %154 = vmatpush1.msra.mxu0 0.0
  %155 = vmatprep.subr.mxu0 0.0
  %156 = vmatpush1.msra.mxu0 0.0
  %157 = vmatprep.subr.mxu0 0.0
  %158 = vmatpush1.msra.mxu0 0.0
  %159 = vmatprep.subr.mxu0 0.0
  %160 = vmatpush1.msra.mxu0 0.0
  %161 = vmatprep.subr.mxu0 0.0
  %162 = vmatpush1.msra.mxu0 0.0
  %163 = vmatprep.subr.mxu0 0.0
  %164 = vmatpush1.msra.mxu0 0.0
  %165 = vmatprep.subr.mxu0 0.0
  %166 = vmatpush1.msra.mxu0 0.0
  %167 = vmatprep.subr.mxu0 0.0
  %168 = vmatpush1.msra.mxu0 0.0
  %169 = vmatprep.subr.mxu0 0.0
  %170 = vmatpush1.msra.mxu0 0.0
  %171 = vmatprep.subr.mxu0 0.0
  %172 = vmatpush1.msra.mxu0 0.0
  %173 = vmatprep.subr.mxu0 0.0
  %174 = vmatpush1.msra.mxu0 0.0
  %175 = vmatprep.subr.mxu0 0.0
  %176 = vmatpush1.msra.mxu0 0.0
  %177 = vmatprep.subr.mxu0 0.0
  %178 = vmatpush1.msra.mxu0 0.0
  %179 = vmatprep.subr.mxu0 0.0
  %180 = vmatpush1.msra.mxu0 0.0
  %181 = vmatprep.subr.mxu0 0.0
  %182 = vmatpush1.msra.mxu0 0.0
  %183 = vmatprep.subr.mxu0 0.0
  %184 = vmatpush1.msra.mxu0 0.0
  %185 = vmatprep.subr.mxu0 0.0
  %186 = vmatpush1.msra.mxu0 0.0
  %187 = vmatprep.subr.mxu0 0.0
  %188 = vmatpush1.msra.mxu0 0.0
  %189 = vmatprep.subr.mxu0 0.0
  %190 = vmatpush1.msra.mxu0 0.0
  %191 = vmatprep.subr.mxu0 0.0
  %192 = vmatpush1.msra.mxu0 0.0
  %193 = vmatprep.subr.mxu0 0.0
  %194 = vmatpush1.msra.mxu0 0.0
  %195 = vmatprep.subr.mxu0 0.0
  %196 = vmatpush1.msra.mxu0 0.0
  %197 = vmatprep.subr.mxu0 0.0
  %198 = vmatpush1.msra.mxu0 0.0
  %199 = vmatprep.subr.mxu0 0.0
  %200 = vmatpush1.msra.mxu0 0.0
  %201 = vmatprep.subr.mxu0 0.0
  %202 = vmatpush1.msra.mxu0 0.0
  %203 = vmatprep.subr.mxu0 0.0
  %204 = vmatpush1.msra.mxu0 0.0
  %205 = vmatprep.subr.mxu0 0.0
  %206 = vmatpush1.msra.mxu0 0.0
  %207 = vmatprep.subr.mxu0 0.0
  %208 = vmatpush1.msra.mxu0 0.0
  %209 = vmatprep.subr.mxu0 0.0
  %210 = vmatpush1.msra.mxu0 0.0
  %211 = vmatprep.subr.mxu0 0.0
  %212 = vmatpush1.msra.mxu0 0.0
  %213 = vmatprep.subr.mxu0 0.0
  %214 = vmatpush1.msra.mxu0 0.0
  %215 = vmatprep.mubr.f32.mxu0 0.0
  %216 = vmatmul.mubr.f32.gmra.mrb[0].mxu0 %v56
  %v217 = vpop.f32.mrb[0].mxu0
  %v218 = vadd.f32 %v52, %v217
  %v219 = vpop.f32.mrb[0].mxu0
  %220 = vmatprep.mubr.f32.mxu0 0.0
  %221 = vmatmul.mubr.f32.gmra.mrb[0].mxu0 %v59
  %v222 = vpop.f32.mrb[0].mxu0
  %v223 = vadd.f32 %v52, %v222
  %v224 = vpop.f32.mrb[0].mxu0
  %225 = vmatprep.mubr.f32.mxu0 0.0
  %226 = vmatmul.mubr.f32.gmra.mrb[0].mxu0 %v62
  %v227 = vpop.f32.mrb[0].mxu0
  %v228 = vadd.f32 %v52, %v227
  %v229 = vpop.f32.mrb[0].mxu0
  %230 = vmatprep.mubr.f32.mxu0 0.0
  %231 = vmatmul.mubr.f32.gmra.mrb[0].mxu0 %v65
  %v232 = vpop.f32.mrb[0].mxu0
  %v233 = vadd.f32 %v52, %v232
  %v234 = vpop.f32.mrb[0].mxu0
  %235 = vmatprep.mubr.f32.mxu0 0.0
  %236 = vmatmul.mubr.f32.gmra.mrb[0].mxu0 %v68
  %v237 = vpop.f32.mrb[0].mxu0
  %v238 = vadd.f32 %v52, %v237
  %v239 = vpop.f32.mrb[0].mxu0
  %240 = vmatprep.mubr.f32.mxu0 0.0
  %241 = vmatmul.mubr.f32.gmra.mrb[0].mxu0 %v71
  %v242 = vpop.f32.mrb[0].mxu0
  %v243 = vadd.f32 %v52, %v242
  %v244 = vpop.f32.mrb[0].mxu0
  %245 = vmatprep.mubr.f32.mxu0 0.0
  %246 = vmatmul.mubr.f32.gmra.mrb[0].mxu0 %v74
  %v247 = vpop.f32.mrb[0].mxu0
  %v248 = vadd.f32 %v52, %v247
  %v249 = vpop.f32.mrb[0].mxu0
  %250 = vmatprep.mubr.f32.mxu0 0.0
  %251 = vmatmul.mubr.f32.gmra.mrb[0].mxu0 %v77
  %v252 = vpop.f32.mrb[0].mxu0
  %v253 = vadd.f32 %v52, %v252
  %v254 = vpop.f32.mrb[0].mxu0
  %255 = vmatprep.mubr.f32.mxu0 0.0
  %256 = vmatmul.mubr.f32.gmra.mrb[0].mxu0 %v80
  %v257 = vpop.f32.mrb[0].mxu0
  %v258 = vadd.f32 %v52, %v257
  %v259 = vpop.f32.mrb[0].mxu0
  %260 = vmatprep.mubr.f32.mxu0 0.0
  %261 = vmatmul.mubr.f32.gmra.mrb[0].mxu0 %v83
  %v262 = vpop.f32.mrb[0].mxu0
  %v263 = vadd.f32 %v52, %v262
  %v264 = vpop.f32.mrb[0].mxu0
  %265 = vmatprep.mubr.f32.mxu0 0.0
  %266 = vmatmul.mubr.f32.gmra.mrb[0].mxu0 %v86
  %v267 = vpop.f32.mrb[0].mxu0
  %v268 = vadd.f32 %v52, %v267
  %v269 = vpop.f32.mrb[0].mxu0
  %270 = vmatprep.mubr.f32.mxu0 0.0
  %271 = vmatmul.mubr.f32.gmra.mrb[0].mxu0 %v89
  %v272 = vpop.f32.mrb[0].mxu0
  %v273 = vadd.f32 %v52, %v272
  %v274 = vpop.f32.mrb[0].mxu0
  %275 = vmatprep.mubr.f32.mxu0 0.0
  %276 = vmatmul.mubr.f32.gmra.mrb[0].mxu0 %v92
  %v277 = vpop.f32.mrb[0].mxu0
  %v278 = vadd.f32 %v52, %v277
  %v279 = vpop.f32.mrb[0].mxu0
  %280 = vmatprep.mubr.f32.mxu0 0.0
  %281 = vmatmul.mubr.f32.gmra.mrb[0].mxu0 %v95
  %v282 = vpop.f32.mrb[0].mxu0
  %v283 = vadd.f32 %v52, %v282
  %v284 = vpop.f32.mrb[0].mxu0
  %285 = vmatprep.mubr.f32.mxu0 0.0
  %286 = vmatmul.mubr.f32.gmra.mrb[0].mxu0 %v98
  %v287 = vpop.f32.mrb[0].mxu0
  %v288 = vadd.f32 %v52, %v287
  %v289 = vpop.f32.mrb[0].mxu0
  %290 = vmatprep.mubr.f32.mxu0 0.0
  %291 = vmatmul.mubr.f32.gmra.mrb[0].mxu0 %v101
  %v292 = vpop.f32.mrb[0].mxu0
  %v293 = vadd.f32 %v52, %v292
  %v294 = vpop.f32.mrb[0].mxu0
  %295 = vmatprep.mubr.f32.mxu0 0.0
  %296 = vmatmul.mubr.f32.gmra.mrb[0].mxu0 %v104
  %v297 = vpop.f32.mrb[0].mxu0
  %v298 = vadd.f32 %v52, %v297
  %v299 = vpop.f32.mrb[0].mxu0
  %300 = vmatprep.mubr.f32.mxu0 0.0
  %301 = vmatmul.mubr.f32.gmra.mrb[0].mxu0 %v107
  %v302 = vpop.f32.mrb[0].mxu0
  %v303 = vadd.f32 %v52, %v302
  %v304 = vpop.f32.mrb[0].mxu0
  %305 = vmatprep.mubr.f32.mxu0 0.0
  %306 = vmatmul.mubr.f32.gmra.mrb[0].mxu0 %v110
  %v307 = vpop.f32.mrb[0].mxu0
  %v308 = vadd.f32 %v52, %v307
  %v309 = vpop.f32.mrb[0].mxu0
  %310 = vmatprep.mubr.f32.mxu0 0.0
  %311 = vmatmul.mubr.f32.gmra.mrb[0].mxu0 %v113
  %v312 = vpop.f32.mrb[0].mxu0
  %v313 = vadd.f32 %v52, %v312
  %v314 = vpop.f32.mrb[0].mxu0
  %315 = vmatprep.mubr.f32.mxu0 0.0
  %316 = vmatmul.mubr.f32.gmra.mrb[0].mxu0 %v116
  %v317 = vpop.f32.mrb[0].mxu0
  %v318 = vadd.f32 %v52, %v317
  %v319 = vpop.f32.mrb[0].mxu0
  %320 = vmatprep.mubr.f32.mxu0 0.0
  %321 = vmatmul.mubr.f32.gmra.mrb[0].mxu0 %v119
  %v322 = vpop.f32.mrb[0].mxu0
  %v323 = vadd.f32 %v52, %v322
  %v324 = vpop.f32.mrb[0].mxu0
  %325 = vmatprep.mubr.f32.mxu0 0.0
  %326 = vmatmul.mubr.f32.gmra.mrb[0].mxu0 %v122
  %v327 = vpop.f32.mrb[0].mxu0
  %v328 = vadd.f32 %v52, %v327
  %v329 = vpop.f32.mrb[0].mxu0
  %330 = vmatprep.mubr.f32.mxu0 0.0
  %331 = vmatmul.mubr.f32.gmra.mrb[0].mxu0 %v125
  %v332 = vpop.f32.mrb[0].mxu0
  %v333 = vadd.f32 %v52, %v332
  %v334 = vpop.f32.mrb[0].mxu0
  %335 = vmatprep.mubr.f32.mxu0 0.0
  %336 = vmatmul.mubr.f32.gmra.mrb[0].mxu0 %v128
  %v337 = vpop.f32.mrb[0].mxu0
  %v338 = vadd.f32 %v52, %v337
  %v339 = vpop.f32.mrb[0].mxu0
  %340 = vmatprep.mubr.f32.mxu0 0.0
  %341 = vmatmul.mubr.f32.gmra.mrb[0].mxu0 %v131
  %v342 = vpop.f32.mrb[0].mxu0
  %v343 = vadd.f32 %v52, %v342
  %v344 = vpop.f32.mrb[0].mxu0
  %345 = vmatprep.mubr.f32.mxu0 0.0
  %346 = vmatmul.mubr.f32.gmra.mrb[0].mxu0 %v134
  %v347 = vpop.f32.mrb[0].mxu0
  %v348 = vadd.f32 %v52, %v347
  %v349 = vpop.f32.mrb[0].mxu0
  %350 = vmatprep.mubr.f32.mxu0 0.0
  %351 = vmatmul.mubr.f32.gmra.mrb[0].mxu0 %v137
  %v352 = vpop.f32.mrb[0].mxu0
  %v353 = vadd.f32 %v52, %v352
  %v354 = vpop.f32.mrb[0].mxu0
  %355 = vmatprep.mubr.f32.mxu0 0.0
  %356 = vmatmul.mubr.f32.gmra.mrb[0].mxu0 %v140
  %v357 = vpop.f32.mrb[0].mxu0
  %v358 = vadd.f32 %v52, %v357
  %v359 = vpop.f32.mrb[0].mxu0
  %360 = vmatprep.mubr.f32.mxu0 0.0
  %361 = vmatmul.mubr.f32.gmra.mrb[0].mxu0 %v143
  %v362 = vpop.f32.mrb[0].mxu0
  %v363 = vadd.f32 %v52, %v362
  %v364 = vpop.f32.mrb[0].mxu0
  %365 = vmatprep.mubr.f32.mxu0 0.0
  %366 = vmatmul.mubr.f32.gmra.mrb[0].mxu0 %v146
  %v367 = vpop.f32.mrb[0].mxu0
  %v368 = vadd.f32 %v52, %v367
  %v369 = vpop.f32.mrb[0].mxu0
  %370 = vmatprep.mubr.f32.mxu0 0.0
  %371 = vmatmul.mubr.f32.gmra.mrb[0].mxu0 %v149
  %v372 = vpop.f32.mrb[0].mxu0
  %v373 = vadd.f32 %v52, %v372
  %v374 = vpop.f32.mrb[0].mxu0
  %375 = vdwg.mxu0
  %vm376 = vcmask 261120
  %377 = vst.msk [vmem:[%s3] sm:$0xff] %vm376, %v218
  %378 = vst.msk [vmem:[%s3 + $0x8] sm:$0xff] %vm376, %v223
  %379 = vst.msk [vmem:[%s3 + $0x10] sm:$0xff] %vm376, %v228
  %380 = vst.msk [vmem:[%s3 + $0x18] sm:$0xff] %vm376, %v233
  %381 = vst.msk [vmem:[%s3 + $0x20] sm:$0xff] %vm376, %v238
  %382 = vst.msk [vmem:[%s3 + $0x28] sm:$0xff] %vm376, %v243
  %383 = vst.msk [vmem:[%s3 + $0x30] sm:$0xff] %vm376, %v248
  %384 = vst.msk [vmem:[%s3 + $0x38] sm:$0xff] %vm376, %v253
  %385 = vst.msk [vmem:[%s3 + $0x40] sm:$0xff] %vm376, %v258
  %386 = vst.msk [vmem:[%s3 + $0x48] sm:$0xff] %vm376, %v263
  %387 = vst.msk [vmem:[%s3 + $0x50] sm:$0xff] %vm376, %v268
  %388 = vst.msk [vmem:[%s3 + $0x58] sm:$0xff] %vm376, %v273
  %389 = vst.msk [vmem:[%s3 + $0x60] sm:$0xff] %vm376, %v278
  %390 = vst.msk [vmem:[%s3 + $0x68] sm:$0xff] %vm376, %v283
  %391 = vst.msk [vmem:[%s3 + $0x70] sm:$0xff] %vm376, %v288
  %392 = vst.msk [vmem:[%s3 + $0x78] sm:$0xff] %vm376, %v293
  %393 = vst.msk [vmem:[%s3 + $0x80] sm:$0xff] %vm376, %v298
  %394 = vst.msk [vmem:[%s3 + $0x88] sm:$0xff] %vm376, %v303
  %395 = vst.msk [vmem:[%s3 + $0x90] sm:$0xff] %vm376, %v308
  %396 = vst.msk [vmem:[%s3 + $0x98] sm:$0xff] %vm376, %v313
  %397 = vst.msk [vmem:[%s3 + $0xa0] sm:$0xff] %vm376, %v318
  %398 = vst.msk [vmem:[%s3 + $0xa8] sm:$0xff] %vm376, %v323
  %399 = vst.msk [vmem:[%s3 + $0xb0] sm:$0xff] %vm376, %v328
  %400 = vst.msk [vmem:[%s3 + $0xb8] sm:$0xff] %vm376, %v333
  %401 = vst.msk [vmem:[%s3 + $0xc0] sm:$0xff] %vm376, %v338
  %402 = vst.msk [vmem:[%s3 + $0xc8] sm:$0xff] %vm376, %v343
  %403 = vst.msk [vmem:[%s3 + $0xd0] sm:$0xff] %vm376, %v348
  %404 = vst.msk [vmem:[%s3 + $0xd8] sm:$0xff] %vm376, %v353
  %405 = vst.msk [vmem:[%s3 + $0xe0] sm:$0xff] %vm376, %v358
  %406 = vst.msk [vmem:[%s3 + $0xe8] sm:$0xff] %vm376, %v363
  %407 = vst.msk [vmem:[%s3 + $0xf0] sm:$0xff] %vm376, %v368
  %408 = vst.msk [vmem:[%s3 + $0xf8] sm:$0xff] %vm376, %v373
  // Predicated region
  $region14: #{tpu_custom_call.1} parent=0 // pred_check
    _
  $region15: #{tpu_custom_call.1} parent=0 // pred_check_branch
    %410 = sbr.rel (0) target = $region17
  $region16: #{tpu_custom_call.1} parent=0 // pred_region
    _
  $region17: #{tpu_custom_call.1} parent=0 // pred_fallthru
    _
  // Predicated region
  $region18: #{tpu_custom_call.1} parent=0 // pred_check
    _
  $region19: #{tpu_custom_call.1} parent=0 // pred_check_branch
    %412 = sbr.rel (0) target = $region21
  $region20: #{tpu_custom_call.1} parent=0 // pred_region
    _
  $region21: #{tpu_custom_call.1} parent=0 // pred_fallthru
    _

</llo_original>
